<compile_context>
chip_gen: v7x
topology: tpu7x:2x2x1
jax: 0.10.0
libtpu: 0.0.40
codegen_flags: <defaults>
</compile_context>

<pallas_src>
import functools

import jax
import jax.numpy as jnp
from jax.experimental import pallas as pl
from jax.experimental.pallas import tpu as pltpu


def _fused_conv_kernel(x_ref, w_ref, b_ref, o_ref, *, K, Wp, L):
    """One batch element.

    x_ref: [1, Cin, Lx]      bf16, flattened padded image (+ K-1 tail pad)
    w_ref: [K*K, Cout, Cin]  bf16, tap-major weights
    b_ref: [Cout, 1]         f32
    o_ref: [1, Cout, L]      f32, L = Hout_full * Wp (cols wo>=Wout are garbage)
    """
    cout = o_ref.shape[1]
    acc = jnp.zeros((cout, L), jnp.float32)
    for kh in range(K):          # K*K taps, unrolled (small)
        for kw in range(K):
            t = kh * K + kw
            d = kh * Wp + kw
            x_tap = x_ref[0, :, d:d + L]          # [Cin, L]   bf16
            w_tap = w_ref[t]                      # [Cout, Cin] bf16
            acc = acc + jnp.dot(w_tap, x_tap,
                                preferred_element_type=jnp.float32)
    o_ref[0] = (acc + b_ref[...]).astype(o_ref.dtype)


def conv_layer_forward(x, weight, bias, *, kernel_size, stride):
    """Forward pass of ConvLayer (ReflectionPad2d(K//2) + Conv2d(K, stride)).

    x:      [N, Cin, H, W]   (NCHW, like PyTorch)
    weight: [Cout, Cin, K, K]
    bias:   [Cout]
    returns [N, Cout, Hout, Wout]
    """
    N, Cin, H, W = x.shape
    Cout = weight.shape[0]
    K = kernel_size
    pad = K // 2  # int(np.floor(kernel_size / 2))
    out_dtype = x.dtype

    # Reflection pad (matches nn.ReflectionPad2d).
    xp = jnp.pad(x, ((0, 0), (0, 0), (pad, pad), (pad, pad)), mode="reflect")
    Hp, Wp = H + 2 * pad, W + 2 * pad

    # Kernel computes the stride-1 "valid" conv on the padded input; stride>1
    # is a cheap subsample of that output afterwards.
    # TODO(synk): for stride>1 fold the subsample into the kernel (strided
    # pl.ds) instead of computing the full stride-1 output.
    Hout_f = Hp - K + 1
    Wout_f = Wp - K + 1
    L = Hout_f * Wp           # flat output length (lane axis of the kernel out)
    Lx = Hp * Wp + (K - 1)    # flat input + K-1 tail so every tap slice is in-bounds

    xflat = xp.reshape(N, Cin, Hp * Wp)
    xflat = jnp.pad(xflat, ((0, 0), (0, 0), (0, K - 1)))
    xflat = xflat.astype(jnp.bfloat16)            # bf16 operands for the MXU

    # [Cout, Cin, K, K] -> [K*K, Cout, Cin]  (done once, tiny)
    w_taps = jnp.transpose(weight, (2, 3, 0, 1)).reshape(K * K, Cout, Cin)
    w_taps = w_taps.astype(jnp.bfloat16)
    b2 = bias.reshape(Cout, 1).astype(jnp.float32)

    kernel = functools.partial(_fused_conv_kernel, K=K, Wp=Wp, L=L)

    # TODO(synk): for large spatial extents, tile Hout into row bands with a
    # (K-1)-row halo (manual make_async_copy) instead of whole-image blocks.
    out_flat = pl.pallas_call(
        kernel,
        out_shape=jax.ShapeDtypeStruct((N, Cout, L), jnp.float32),
        grid_spec=pltpu.PrefetchScalarGridSpec(
            num_scalar_prefetch=0,
            grid=(N,),
            in_specs=[
                pl.BlockSpec((1, Cin, Lx), lambda n: (n, 0, 0)),
                pl.BlockSpec((K * K, Cout, Cin), lambda n: (0, 0, 0)),
                pl.BlockSpec((Cout, 1), lambda n: (0, 0)),
            ],
            out_specs=pl.BlockSpec((1, Cout, L), lambda n: (n, 0, 0)),
        ),
        compiler_params=pltpu.CompilerParams(
            dimension_semantics=("parallel",)),
    )(xflat, w_taps, b2)

    # Free reshape into NCHW; drop the (K-1) wrap-around garbage columns.
    out = out_flat.reshape(N, Cout, Hout_f, Wp)[:, :, :, :Wout_f]
    if stride > 1:
        out = out[:, :, ::stride, ::stride]
    return out.astype(out_dtype)


def init_conv_layer_params(key, in_channels, out_channels, kernel_size,
                           dtype=jnp.float32):
    """Deterministic synthetic init (shapes match nn.Conv2d)."""
    kw_key, kb_key = jax.random.split(key)
    fan_in = in_channels * kernel_size * kernel_size
    bound = 1.0 / jnp.sqrt(fan_in)
    weight = jax.random.uniform(
        kw_key, (out_channels, in_channels, kernel_size, kernel_size),
        dtype=dtype, minval=-bound, maxval=bound)
    bias = jax.random.uniform(
        kb_key, (out_channels,), dtype=dtype, minval=-bound, maxval=bound)
    return weight, bias


if __name__ == "__main__":
    # Small shapes consistent with the module.
    N, Cin, H, W = 2, 4, 16, 16
    Cout, K, stride = 8, 3, 1

    key = jax.random.PRNGKey(0)
    k_x, k_p = jax.random.split(key)
    x = jax.random.normal(k_x, (N, Cin, H, W), dtype=jnp.float32)
    weight, bias = init_conv_layer_params(k_p, Cin, Cout, K)

    fwd = jax.jit(functools.partial(conv_layer_forward,
                                    kernel_size=K, stride=stride))
    out = jax.block_until_ready(fwd(x, weight, bias))

    # Reference: same bf16 operands / f32 accumulation via XLA's native conv
    # on the reflection-padded input.
    xp = jnp.pad(x, ((0, 0), (0, 0), (1, 1), (1, 1)), mode="reflect")
    ref = jax.lax.conv_general_dilated(
        xp.astype(jnp.bfloat16), weight.astype(jnp.bfloat16),
        window_strides=(stride, stride), padding="VALID",
        dimension_numbers=("NCHW", "OIHW", "NCHW"),
        preferred_element_type=jnp.float32) + bias[None, :, None, None]

    assert out.shape == (N, Cout, H, W), out.shape
    assert jnp.allclose(out, ref, atol=1e-2, rtol=1e-2), \
        float(jnp.max(jnp.abs(out - ref)))

    print("KERNEL_OK")
</pallas_src>

<mosaic_0001>
module attributes {stable_mosaic.version = 11 : i64} {
  func.func @_fused_conv_kernel(%arg0: i32, %arg1: memref<1x4x326xbf16, #tpu.memory_space<vmem>>, %arg2: memref<9x8x4xbf16, #tpu.memory_space<vmem>>, %arg3: memref<8x1xf32, #tpu.memory_space<vmem>>, %arg4: memref<1x8x288xf32, #tpu.memory_space<vmem>>) attributes {dimension_semantics = [#tpu.dimension_semantics<parallel>], iteration_bounds = array<i64: 2>, scalar_prefetch = 0 : i64, scratch_operands = 0 : i64, tpu.core_type = #tpu.core_type<tc>, window_params = [{transform_indices = @transform_0, window_bounds = array<i64: 1, 4, 326>}, {pipeline_mode = #tpu.pipeline_mode<synchronous>, transform_indices = @transform_1, window_bounds = array<i64: 9, 8, 4>}, {pipeline_mode = #tpu.pipeline_mode<synchronous>, transform_indices = @transform_2, window_bounds = array<i64: 8, 1>}, {transform_indices = @transform_3, window_bounds = array<i64: 1, 8, 288>}]} {
    %cst = arith.constant 0.000000e+00 : f32
    %0 = vector.broadcast %cst : f32 to vector<8x288xf32>
    %c0 = arith.constant 0 : index
    %c0_0 = arith.constant 0 : index
    %c0_1 = arith.constant 0 : index
    %1 = vector.load %arg1[%c0, %c0_0, %c0_1] : memref<1x4x326xbf16, #tpu.memory_space<vmem>>, vector<1x4x288xbf16>
    %2 = vector.shape_cast %1 : vector<1x4x288xbf16> to vector<4x288xbf16>
    %c0_2 = arith.constant 0 : index
    %c0_3 = arith.constant 0 : index
    %c0_4 = arith.constant 0 : index
    %3 = vector.load %arg2[%c0_2, %c0_3, %c0_4] : memref<9x8x4xbf16, #tpu.memory_space<vmem>>, vector<1x8x4xbf16>
    %4 = vector.shape_cast %3 : vector<1x8x4xbf16> to vector<8x4xbf16>
    %cst_5 = arith.constant dense<0.000000e+00> : vector<8x288xf32>
    %5 = tpu.matmul %4, %2, %cst_5 {dimension_numbers = #tpu.dot_dimension_numbers<[1], [0], [0], [1], [0, 0, 1, 1], [], []>} : vector<8x4xbf16>, vector<4x288xbf16>, vector<8x288xf32> -> vector<8x288xf32>
    %6 = arith.addf %0, %5 : vector<8x288xf32>
    %c0_6 = arith.constant 0 : index
    %c0_7 = arith.constant 0 : index
    %c1 = arith.constant 1 : index
    %7 = vector.load %arg1[%c0_6, %c0_7, %c1] : memref<1x4x326xbf16, #tpu.memory_space<vmem>>, vector<1x4x288xbf16>
    %8 = vector.shape_cast %7 : vector<1x4x288xbf16> to vector<4x288xbf16>
    %c1_8 = arith.constant 1 : index
    %c0_9 = arith.constant 0 : index
    %c0_10 = arith.constant 0 : index
    %9 = vector.load %arg2[%c1_8, %c0_9, %c0_10] : memref<9x8x4xbf16, #tpu.memory_space<vmem>>, vector<1x8x4xbf16>
    %10 = vector.shape_cast %9 : vector<1x8x4xbf16> to vector<8x4xbf16>
    %cst_11 = arith.constant dense<0.000000e+00> : vector<8x288xf32>
    %11 = tpu.matmul %10, %8, %cst_11 {dimension_numbers = #tpu.dot_dimension_numbers<[1], [0], [0], [1], [0, 0, 1, 1], [], []>} : vector<8x4xbf16>, vector<4x288xbf16>, vector<8x288xf32> -> vector<8x288xf32>
    %12 = arith.addf %6, %11 : vector<8x288xf32>
    %c0_12 = arith.constant 0 : index
    %c0_13 = arith.constant 0 : index
    %c2 = arith.constant 2 : index
    %13 = vector.load %arg1[%c0_12, %c0_13, %c2] : memref<1x4x326xbf16, #tpu.memory_space<vmem>>, vector<1x4x288xbf16>
    %14 = vector.shape_cast %13 : vector<1x4x288xbf16> to vector<4x288xbf16>
    %c2_14 = arith.constant 2 : index
    %c0_15 = arith.constant 0 : index
    %c0_16 = arith.constant 0 : index
    %15 = vector.load %arg2[%c2_14, %c0_15, %c0_16] : memref<9x8x4xbf16, #tpu.memory_space<vmem>>, vector<1x8x4xbf16>
    %16 = vector.shape_cast %15 : vector<1x8x4xbf16> to vector<8x4xbf16>
    %cst_17 = arith.constant dense<0.000000e+00> : vector<8x288xf32>
    %17 = tpu.matmul %16, %14, %cst_17 {dimension_numbers = #tpu.dot_dimension_numbers<[1], [0], [0], [1], [0, 0, 1, 1], [], []>} : vector<8x4xbf16>, vector<4x288xbf16>, vector<8x288xf32> -> vector<8x288xf32>
    %18 = arith.addf %12, %17 : vector<8x288xf32>
    %c0_18 = arith.constant 0 : index
    %c0_19 = arith.constant 0 : index
    %c18 = arith.constant 18 : index
    %19 = vector.load %arg1[%c0_18, %c0_19, %c18] : memref<1x4x326xbf16, #tpu.memory_space<vmem>>, vector<1x4x288xbf16>
    %20 = vector.shape_cast %19 : vector<1x4x288xbf16> to vector<4x288xbf16>
    %c3 = arith.constant 3 : index
    %c0_20 = arith.constant 0 : index
    %c0_21 = arith.constant 0 : index
    %21 = vector.load %arg2[%c3, %c0_20, %c0_21] : memref<9x8x4xbf16, #tpu.memory_space<vmem>>, vector<1x8x4xbf16>
    %22 = vector.shape_cast %21 : vector<1x8x4xbf16> to vector<8x4xbf16>
    %cst_22 = arith.constant dense<0.000000e+00> : vector<8x288xf32>
    %23 = tpu.matmul %22, %20, %cst_22 {dimension_numbers = #tpu.dot_dimension_numbers<[1], [0], [0], [1], [0, 0, 1, 1], [], []>} : vector<8x4xbf16>, vector<4x288xbf16>, vector<8x288xf32> -> vector<8x288xf32>
    %24 = arith.addf %18, %23 : vector<8x288xf32>
    %c0_23 = arith.constant 0 : index
    %c0_24 = arith.constant 0 : index
    %c19 = arith.constant 19 : index
    %25 = vector.load %arg1[%c0_23, %c0_24, %c19] : memref<1x4x326xbf16, #tpu.memory_space<vmem>>, vector<1x4x288xbf16>
    %26 = vector.shape_cast %25 : vector<1x4x288xbf16> to vector<4x288xbf16>
    %c4 = arith.constant 4 : index
    %c0_25 = arith.constant 0 : index
    %c0_26 = arith.constant 0 : index
    %27 = vector.load %arg2[%c4, %c0_25, %c0_26] : memref<9x8x4xbf16, #tpu.memory_space<vmem>>, vector<1x8x4xbf16>
    %28 = vector.shape_cast %27 : vector<1x8x4xbf16> to vector<8x4xbf16>
    %cst_27 = arith.constant dense<0.000000e+00> : vector<8x288xf32>
    %29 = tpu.matmul %28, %26, %cst_27 {dimension_numbers = #tpu.dot_dimension_numbers<[1], [0], [0], [1], [0, 0, 1, 1], [], []>} : vector<8x4xbf16>, vector<4x288xbf16>, vector<8x288xf32> -> vector<8x288xf32>
    %30 = arith.addf %24, %29 : vector<8x288xf32>
    %c0_28 = arith.constant 0 : index
    %c0_29 = arith.constant 0 : index
    %c20 = arith.constant 20 : index
    %31 = vector.load %arg1[%c0_28, %c0_29, %c20] : memref<1x4x326xbf16, #tpu.memory_space<vmem>>, vector<1x4x288xbf16>
    %32 = vector.shape_cast %31 : vector<1x4x288xbf16> to vector<4x288xbf16>
    %c5 = arith.constant 5 : index
    %c0_30 = arith.constant 0 : index
    %c0_31 = arith.constant 0 : index
    %33 = vector.load %arg2[%c5, %c0_30, %c0_31] : memref<9x8x4xbf16, #tpu.memory_space<vmem>>, vector<1x8x4xbf16>
    %34 = vector.shape_cast %33 : vector<1x8x4xbf16> to vector<8x4xbf16>
    %cst_32 = arith.constant dense<0.000000e+00> : vector<8x288xf32>
    %35 = tpu.matmul %34, %32, %cst_32 {dimension_numbers = #tpu.dot_dimension_numbers<[1], [0], [0], [1], [0, 0, 1, 1], [], []>} : vector<8x4xbf16>, vector<4x288xbf16>, vector<8x288xf32> -> vector<8x288xf32>
    %36 = arith.addf %30, %35 : vector<8x288xf32>
    %c0_33 = arith.constant 0 : index
    %c0_34 = arith.constant 0 : index
    %c36 = arith.constant 36 : index
    %37 = vector.load %arg1[%c0_33, %c0_34, %c36] : memref<1x4x326xbf16, #tpu.memory_space<vmem>>, vector<1x4x288xbf16>
    %38 = vector.shape_cast %37 : vector<1x4x288xbf16> to vector<4x288xbf16>
    %c6 = arith.constant 6 : index
    %c0_35 = arith.constant 0 : index
    %c0_36 = arith.constant 0 : index
    %39 = vector.load %arg2[%c6, %c0_35, %c0_36] : memref<9x8x4xbf16, #tpu.memory_space<vmem>>, vector<1x8x4xbf16>
    %40 = vector.shape_cast %39 : vector<1x8x4xbf16> to vector<8x4xbf16>
    %cst_37 = arith.constant dense<0.000000e+00> : vector<8x288xf32>
    %41 = tpu.matmul %40, %38, %cst_37 {dimension_numbers = #tpu.dot_dimension_numbers<[1], [0], [0], [1], [0, 0, 1, 1], [], []>} : vector<8x4xbf16>, vector<4x288xbf16>, vector<8x288xf32> -> vector<8x288xf32>
    %42 = arith.addf %36, %41 : vector<8x288xf32>
    %c0_38 = arith.constant 0 : index
    %c0_39 = arith.constant 0 : index
    %c37 = arith.constant 37 : index
    %43 = vector.load %arg1[%c0_38, %c0_39, %c37] : memref<1x4x326xbf16, #tpu.memory_space<vmem>>, vector<1x4x288xbf16>
    %44 = vector.shape_cast %43 : vector<1x4x288xbf16> to vector<4x288xbf16>
    %c7 = arith.constant 7 : index
    %c0_40 = arith.constant 0 : index
    %c0_41 = arith.constant 0 : index
    %45 = vector.load %arg2[%c7, %c0_40, %c0_41] : memref<9x8x4xbf16, #tpu.memory_space<vmem>>, vector<1x8x4xbf16>
    %46 = vector.shape_cast %45 : vector<1x8x4xbf16> to vector<8x4xbf16>
    %cst_42 = arith.constant dense<0.000000e+00> : vector<8x288xf32>
    %47 = tpu.matmul %46, %44, %cst_42 {dimension_numbers = #tpu.dot_dimension_numbers<[1], [0], [0], [1], [0, 0, 1, 1], [], []>} : vector<8x4xbf16>, vector<4x288xbf16>, vector<8x288xf32> -> vector<8x288xf32>
    %48 = arith.addf %42, %47 : vector<8x288xf32>
    %c0_43 = arith.constant 0 : index
    %c0_44 = arith.constant 0 : index
    %c38 = arith.constant 38 : index
    %49 = vector.load %arg1[%c0_43, %c0_44, %c38] : memref<1x4x326xbf16, #tpu.memory_space<vmem>>, vector<1x4x288xbf16>
    %50 = vector.shape_cast %49 : vector<1x4x288xbf16> to vector<4x288xbf16>
    %c8 = arith.constant 8 : index
    %c0_45 = arith.constant 0 : index
    %c0_46 = arith.constant 0 : index
    %51 = vector.load %arg2[%c8, %c0_45, %c0_46] : memref<9x8x4xbf16, #tpu.memory_space<vmem>>, vector<1x8x4xbf16>
    %52 = vector.shape_cast %51 : vector<1x8x4xbf16> to vector<8x4xbf16>
    %cst_47 = arith.constant dense<0.000000e+00> : vector<8x288xf32>
    %53 = tpu.matmul %52, %50, %cst_47 {dimension_numbers = #tpu.dot_dimension_numbers<[1], [0], [0], [1], [0, 0, 1, 1], [], []>} : vector<8x4xbf16>, vector<4x288xbf16>, vector<8x288xf32> -> vector<8x288xf32>
    %54 = arith.addf %48, %53 : vector<8x288xf32>
    %c0_48 = arith.constant 0 : index
    %c0_49 = arith.constant 0 : index
    %55 = vector.load %arg3[%c0_48, %c0_49] : memref<8x1xf32, #tpu.memory_space<vmem>>, vector<8x1xf32>
    %56 = vector.broadcast %55 : vector<8x1xf32> to vector<8x288xf32>
    %57 = arith.addf %54, %56 : vector<8x288xf32>
    %c0_50 = arith.constant 0 : index
    %c0_51 = arith.constant 0 : index
    %c0_52 = arith.constant 0 : index
    %58 = vector.load %arg4[%c0_50, %c0_51, %c0_52] : memref<1x8x288xf32, #tpu.memory_space<vmem>>, vector<1x8x288xf32>
    %59 = vector.shape_cast %58 : vector<1x8x288xf32> to vector<8x288xf32>
    %60 = vector.shape_cast %57 : vector<8x288xf32> to vector<1x8x288xf32>
    tpu.vector_store %arg4[%c0_50, %c0_51, %c0_52], %60 {strides = array<i32>} : memref<1x8x288xf32, #tpu.memory_space<vmem>>, vector<1x8x288xf32>,
    return
  }
  func.func @transform_0(%arg0: i32) -> (i32, i32, i32) {
    %c0_i32 = arith.constant 0 : i32
    %c0_i32_0 = arith.constant 0 : i32
    %c0_i32_1 = arith.constant 0 : i32
    return %arg0, %c0_i32, %c0_i32_0 : i32, i32, i32
  }
  func.func @transform_1(%arg0: i32) -> (i32, i32, i32) {
    %c0_i32 = arith.constant 0 : i32
    %c0_i32_0 = arith.constant 0 : i32
    %c0_i32_1 = arith.constant 0 : i32
    %c0_i32_2 = arith.constant 0 : i32
    return %c0_i32, %c0_i32_0, %c0_i32_1 : i32, i32, i32
  }
  func.func @transform_2(%arg0: i32) -> (i32, i32) {
    %c0_i32 = arith.constant 0 : i32
    %c0_i32_0 = arith.constant 0 : i32
    %c0_i32_1 = arith.constant 0 : i32
    return %c0_i32, %c0_i32_0 : i32, i32
  }
  func.func @transform_3(%arg0: i32) -> (i32, i32, i32) {
    %c0_i32 = arith.constant 0 : i32
    %c0_i32_0 = arith.constant 0 : i32
    %c0_i32_1 = arith.constant 0 : i32
    return %arg0, %c0_i32, %c0_i32_0 : i32, i32, i32
  }
}

</mosaic_0001>

<llo_original>
// kernel: conv_layer_forward.1
$region0: #{conv_layer_forward.1}
  #allocation0 [shape = 'u32[]', space=smem, size = 0x4, offset = 0x4, fixed_abs, tag = 'smem constant byte address 0x4 - core index']
  #allocation1 [shape = 'u32[144,128]{1,0:T(1,128)}', space=vmem, size = 0x12000, scoped, tag = 'internal scratch']
  %s0 = inlined_call_operand.vmem [shape: bf16[2,4,326], index: 0, kind: input, shape index: {}]
  %s1 = inlined_call_operand.vmem [shape: bf16[9,8,4], index: 1, kind: input, shape index: {}]
  %s2 = inlined_call_operand.vmem [shape: f32[8,1], index: 2, kind: input, shape index: {}]
  %s3 = inlined_call_operand.vmem [shape: f32[2,8,288], index: 3, kind: output, shape index: {}]
  %s4 = sld [smem:[#allocation0]]
  $region45: #{conv_layer_forward.1} parent=0
    _
  %s6 = ssub.s32 1, %s4
  %s7 = scalar_select 0, %s6, %s4
  loop: start=0, step=1, limit=4
  $region2: #{conv_layer_forward.1} parent=0 // loop_pre_header
    _
  $region3: #{conv_layer_forward.1} parent=0 // loop_header
    %s9 = sphi 0, %s13
    %p10 = scmp.ge.s32.totalorder %s9, 4
    %s19 = sphi 0, %s21
    %s22 = sphi 0, %s19
    %s23 = sphi 0, %s22
    %s39 = sphi 0, %s23
    %s43 = sphi 0, %s43
    %s45 = sphi 0, %s43
    %s46 = sphi 0, %s45
    %s60 = sphi 0, %s46
    %s64 = sphi 0, %s64
    %s66 = sphi 0, %s64
    %s67 = sphi 0, %s66
    %s81 = sphi 0, %s67
    %s87 = sphi 0, %s89
    %s90 = sphi 0, %s87
    %s91 = sphi 0, %s90
    %s107 = sphi 0, %s91
  $region4: #{conv_layer_forward.1} parent=0 // loop_header_branch
    %12 = sbr.rel (%p10) target = $region8
  $region5: #{conv_layer_forward.1} parent=0 // loop_body
    %s14 = ssub.s32 %s9, 1
    %s15 = ssub.s32 %s9, 2
    %s16 = sadd.s32 %s9, 1
    %s17 = ssub.s32 %s9, %s16
    %p18 = scmp.eq.s32.totalorder %s17, 0
    %s20 = sadd.s32 %s19, 1
    %s21 = scalar_select %p18, %s19, %s20
    %p24 = pneg %p18
    %p25 = scmp.eq.s32.totalorder %s9, 1
    %p26 = por %p24, %p25
    %p27 = scmp.ne.s32.totalorder %s19, %s22
    %p28 = scmp.eq.s32.totalorder %s9, 0
    %p29 = por %p27, %p28
    %p30 = scmp.ne.s32.totalorder %s19, %s22
    %p31 = scmp.eq.s32.totalorder %s14, 1
    %p32 = por %p30, %p31
    %p33 = scmp.ne.s32.totalorder %s22, %s23
    %p34 = scmp.eq.s32.totalorder %s14, 0
    %p35 = por %p33, %p34
    %p36 = scmp.ne.s32.totalorder %s22, %s23
    %p37 = scmp.eq.s32.totalorder %s15, 1
    %p38 = por %p36, %p37
    %p40 = scmp.ne.s32.totalorder %s23, %s39
    %p41 = scmp.eq.s32.totalorder %s15, 0
    %p42 = por %p40, %p41
    %s44 = sadd.s32 %s43, 1
    %p47 = scmp.eq.s32.totalorder %s9, 1
    %p48 = scmp.ne.s32.totalorder %s43, %s45
    %p49 = scmp.eq.s32.totalorder %s9, 0
    %p50 = por %p48, %p49
    %p51 = scmp.ne.s32.totalorder %s43, %s45
    %p52 = scmp.eq.s32.totalorder %s14, 1
    %p53 = por %p51, %p52
    %p54 = scmp.ne.s32.totalorder %s45, %s46
    %p55 = scmp.eq.s32.totalorder %s14, 0
    %p56 = por %p54, %p55
    %p57 = scmp.ne.s32.totalorder %s45, %s46
    %p58 = scmp.eq.s32.totalorder %s15, 1
    %p59 = por %p57, %p58
    %p61 = scmp.ne.s32.totalorder %s46, %s60
    %p62 = scmp.eq.s32.totalorder %s15, 0
    %p63 = por %p61, %p62
    %s65 = sadd.s32 %s64, 1
    %p68 = scmp.eq.s32.totalorder %s9, 1
    %p69 = scmp.ne.s32.totalorder %s64, %s66
    %p70 = scmp.eq.s32.totalorder %s9, 0
    %p71 = por %p69, %p70
    %p72 = scmp.ne.s32.totalorder %s64, %s66
    %p73 = scmp.eq.s32.totalorder %s14, 1
    %p74 = por %p72, %p73
    %p75 = scmp.ne.s32.totalorder %s66, %s67
    %p76 = scmp.eq.s32.totalorder %s14, 0
    %p77 = por %p75, %p76
    %p78 = scmp.ne.s32.totalorder %s66, %s67
    %p79 = scmp.eq.s32.totalorder %s15, 1
    %p80 = por %p78, %p79
    %p82 = scmp.ne.s32.totalorder %s67, %s81
    %p83 = scmp.eq.s32.totalorder %s15, 0
    %p84 = por %p82, %p83
    %s85 = ssub.s32 %s9, %s16
    %p86 = scmp.eq.s32.totalorder %s85, 0
    %s88 = sadd.s32 %s87, 1
    %s89 = scalar_select %p86, %s87, %s88
    %p92 = pneg %p86
    %p93 = scmp.eq.s32.totalorder %s9, 1
    %p94 = por %p92, %p93
    %p95 = scmp.ne.s32.totalorder %s87, %s90
    %p96 = scmp.eq.s32.totalorder %s9, 0
    %p97 = por %p95, %p96
    %p98 = scmp.ne.s32.totalorder %s87, %s90
    %p99 = scmp.eq.s32.totalorder %s14, 1
    %p100 = por %p98, %p99
    %p101 = scmp.ne.s32.totalorder %s90, %s91
    %p102 = scmp.eq.s32.totalorder %s14, 0
    %p103 = por %p101, %p102
    %p104 = scmp.ne.s32.totalorder %s90, %s91
    %p105 = scmp.eq.s32.totalorder %s15, 1
    %p106 = por %p104, %p105
    %p108 = scmp.ne.s32.totalorder %s91, %s107
    %p109 = scmp.eq.s32.totalorder %s15, 0
    %p110 = por %p108, %p109
    %p111 = scmp.le.s32.totalorder 1, %s9
    %p112 = scmp.lt.s32.totalorder %s9, 3
    %p113 = pnand %p111, %p112
    %p114 = pneg %p113
    // Predicated region
    $region9: #{conv_layer_forward.1} parent=5 // pred_check
      _
    $region10: #{conv_layer_forward.1} parent=5 // pred_check_branch
      %116 = sbr.rel (%p113) target = $region12
    $region11: #{conv_layer_forward.1} parent=5 // pred_region
      %s117 = ssub.s32 %s9, 1
      // Predicated region
      $region13: #{conv_layer_forward.1} parent=11 // pred_check
        %p118 = pneg %p56
      $region14: #{conv_layer_forward.1} parent=11 // pred_check_branch
        %120 = sbr.rel (%p118) target = $region16
      $region15: #{conv_layer_forward.1} parent=11 // pred_region
        _
      $region16: #{conv_layer_forward.1} parent=11 // pred_fallthru
        _
      // Predicated region
      $region17: #{conv_layer_forward.1} parent=11 // pred_check
        %p121 = pneg %p77
      $region18: #{conv_layer_forward.1} parent=11 // pred_check_branch
        %123 = sbr.rel (%p121) target = $region20
      $region19: #{conv_layer_forward.1} parent=11 // pred_region
        _
      $region20: #{conv_layer_forward.1} parent=11 // pred_fallthru
        _
    $region12: #{conv_layer_forward.1} parent=5 // pred_fallthru
      _
    %p124 = scmp.lt.s32.totalorder %s9, 2
    // Predicated region
    $region21: #{conv_layer_forward.1} parent=5 // pred_check
      %p125 = pneg %p124
    $region22: #{conv_layer_forward.1} parent=5 // pred_check_branch
      %127 = sbr.rel (%p125) target = $region24
    $region23: #{conv_layer_forward.1} parent=5 // pred_region
      // Predicated region
      $region25: #{conv_layer_forward.1} parent=23 // pred_check
        %p128 = pneg %p29
      $region26: #{conv_layer_forward.1} parent=23 // pred_check_branch
        %130 = sbr.rel (%p128) target = $region28
      $region27: #{conv_layer_forward.1} parent=23 // pred_region
        %p131 = scmp.lt.s32.totalorder %s9, 1
        %s132 = scalar_select %p131, %s9, 1
        %s133 = smul.addr %s132, 3
        %s134 = smul.addr %s133, 2
        %s135 = scalar_lea.vmem %s0, %s134
      $region28: #{conv_layer_forward.1} parent=23 // pred_fallthru
        _
    $region24: #{conv_layer_forward.1} parent=5 // pred_fallthru
      _
    %p136 = scmp.le.s32.totalorder 1, %s9
    %p137 = scmp.lt.s32.totalorder %s9, 3
    %p138 = pnand %p136, %p137
    %p139 = pneg %p138
    // Predicated region
    $region29: #{conv_layer_forward.1} parent=5 // pred_check
      _
    $region30: #{conv_layer_forward.1} parent=5 // pred_check_branch
      %141 = sbr.rel (%p138) target = $region32
    $region31: #{conv_layer_forward.1} parent=5 // pred_region
      %s142 = ssub.s32 %s9, 1
      %p143 = scmp.lt.s32.totalorder %s14, 1
      %s144 = scalar_select %p143, %s14, 1
      %s145 = smul.addr %s144, 3
      %s146 = smul.addr %s145, 2
      %s147 = scalar_lea.vmem %s0, %s146
      %p148 = pneg %p35
      %p149 = pneg %p32
      %p150 = pneg %p56
      %p151 = pneg %p53
      %p152 = pneg %p77
      %p153 = pneg %p74
      %p154 = pneg %p103
      %p155 = pneg %p100
      %p156 = scmp.lt.s32.totalorder %s14, 1
      %s157 = scalar_select %p156, %s14, 1
      %s158 = smul.addr %s157, 3
      %s159 = smul.addr %s158, 8
      %s160 = scalar_lea.vmem %s3, %s159
      %p161 = scmp.lt.s32.totalorder %s14, 1
      %s162 = scalar_select %p161, %s14, 1
      %s163 = smul.addr %s162, 3
      %s164 = smul.addr %s163, 2
      %s165 = scalar_lea.vmem %s0, %s164
      %p166 = scmp.lt.s32.totalorder %s14, 1
      %s167 = scalar_select %p166, %s14, 1
      %s168 = smul.addr %s167, 3
      %s169 = smul.addr %s168, 8
      %s170 = scalar_lea.vmem %s3, %s169
      %v172 = vld [vmem:[%s165] sm:$0x3f]
      %v173 = vld [vmem:[%s1] sm:$0xf]
      %s174 = scalar_lea.vmem %s1, 4
      %v175 = vld [vmem:[%s174] sm:$0xf]
      %v177 = vcombine.high %v172, %v172
      %v179 = vunpack.c.l.s4 1983009808
      %v180 = vunpack.c.0.s8 %v179
      %v181 = vlaneseq
      %v182 = vshrl.u32 %v181, 7
      %v183 = vsub.s32 %v180, %v182
      %v184 = vrot.slane %v172, %v183
      %v186 = vunpack.c.l.s4 1983009808
      %v187 = vunpack.c.0.s8 %v186
      %v188 = vlaneseq
      %v189 = vshrl.u32 %v188, 7
      %v190 = vsub.s32 %v187, %v189
      %v191 = vrot.slane %v177, %v190
      %v192 = vcombine.high %v184, %v184
      %193 = vrot.lane.b32.xlu0 %v184, 127
      %v194 = vpop.permute.xlu0 %193
      %195 = vrot.lane.b32.xlu0 %v192, 127
      %v196 = vpop.permute.xlu0 %195
      %197 = vrot.lane.b32.xlu0 %v191, 127
      %v198 = vpop.permute.xlu0 %197
      %vm199 = vcmask 1039360
      %v200 = vsel %vm199, %v194, %v196
      %v201 = vsel %vm199, %v196, %v198
      %vm202 = vcmask 31744
      %v204 = vsel %vm202, %v175, 0
      %vm206 = vcmask 1041408
      %v208 = vsel %vm206, %v200, 0
      %v211 = vsel %vm206, %v201, 0
      %v214 = vsel %vm206, %v198, 0
      %216 = vmatprep.subr.bf16.mxu0 %v211
      %217 = vmatpush1.bf16.msra.mxu0 %v208
      %218 = vmatprep.subr.bf16.mxu0 0
      %219 = vmatpush1.bf16.msra.mxu0 0
      %220 = vmatprep.subr.bf16.mxu0 0
      %221 = vmatpush1.bf16.msra.mxu0 0
      %222 = vmatprep.subr.bf16.mxu0 0
      %223 = vmatpush1.bf16.msra.mxu0 0
      %224 = vmatprep.subr.bf16.mxu0 0
      %225 = vmatpush1.bf16.msra.mxu0 0
      %226 = vmatprep.subr.bf16.mxu0 0
      %227 = vmatpush1.bf16.msra.mxu0 0
      %228 = vmatprep.subr.bf16.mxu0 0
      %229 = vmatpush1.bf16.msra.mxu0 0
      %230 = vmatprep.subr.bf16.mxu0 0
      %231 = vmatpush1.bf16.msra.mxu0 0
      %232 = vmatprep.subr.bf16.mxu0 0
      %233 = vmatpush1.bf16.msra.mxu0 0
      %234 = vmatprep.subr.bf16.mxu0 0
      %235 = vmatpush1.bf16.msra.mxu0 0
      %236 = vmatprep.subr.bf16.mxu0 0
      %237 = vmatpush1.bf16.msra.mxu0 0
      %238 = vmatprep.subr.bf16.mxu0 0
      %239 = vmatpush1.bf16.msra.mxu0 0
      %240 = vmatprep.subr.bf16.mxu0 0
      %241 = vmatpush1.bf16.msra.mxu0 0
      %242 = vmatprep.subr.bf16.mxu0 0
      %243 = vmatpush1.bf16.msra.mxu0 0
      %244 = vmatprep.subr.bf16.mxu0 0
      %245 = vmatpush1.bf16.msra.mxu0 0
      %246 = vmatprep.subr.bf16.mxu0 0
      %247 = vmatpush1.bf16.msra.mxu0 0
      %248 = vmatprep.mubr.bf16.mxu0 0
      %249 = vmatmul.mubr.bf16.gmra.mrb[0].mxu0 %v204
      %v250 = vpop.f32.mrb[0].mxu0
      %v251 = vadd.f32 0.0, %v250
      %v252 = vpop.f32.mrb[0].mxu0
      %v253 = vadd.f32 0.0, %v252
      %v254 = vpop.f32.mrb[0].mxu0
      %v255 = vpop.f32.mrb[0].mxu0
      %256 = vdwg.mxu0
      %257 = vmatprep.subr.bf16.mxu0 0
      %258 = vmatpush1.bf16.msra.mxu0 %v214
      %259 = vmatprep.subr.bf16.mxu0 0
      %260 = vmatpush1.bf16.msra.mxu0 0
      %261 = vmatprep.subr.bf16.mxu0 0
      %262 = vmatpush1.bf16.msra.mxu0 0
      %263 = vmatprep.subr.bf16.mxu0 0
      %264 = vmatpush1.bf16.msra.mxu0 0
      %265 = vmatprep.subr.bf16.mxu0 0
      %266 = vmatpush1.bf16.msra.mxu0 0
      %267 = vmatprep.subr.bf16.mxu0 0
      %268 = vmatpush1.bf16.msra.mxu0 0
      %269 = vmatprep.subr.bf16.mxu0 0
      %270 = vmatpush1.bf16.msra.mxu0 0
      %271 = vmatprep.subr.bf16.mxu0 0
      %272 = vmatpush1.bf16.msra.mxu0 0
      %273 = vmatprep.subr.bf16.mxu0 0
      %274 = vmatpush1.bf16.msra.mxu0 0
      %275 = vmatprep.subr.bf16.mxu0 0
      %276 = vmatpush1.bf16.msra.mxu0 0
      %277 = vmatprep.subr.bf16.mxu0 0
      %278 = vmatpush1.bf16.msra.mxu0 0
      %279 = vmatprep.subr.bf16.mxu0 0
      %280 = vmatpush1.bf16.msra.mxu0 0
      %281 = vmatprep.subr.bf16.mxu0 0
      %282 = vmatpush1.bf16.msra.mxu0 0
      %283 = vmatprep.subr.bf16.mxu0 0
      %284 = vmatpush1.bf16.msra.mxu0 0
      %285 = vmatprep.subr.bf16.mxu0 0
      %286 = vmatpush1.bf16.msra.mxu0 0
      %287 = vmatprep.subr.bf16.mxu0 0
      %288 = vmatpush1.bf16.msra.mxu0 0
      %289 = vmatprep.mubr.bf16.mxu0 0
      %290 = vmatmul.mubr.bf16.gmra.mrb[0].mxu0 %v204
      %v291 = vpop.f32.mrb[0].mxu0
      %v292 = vadd.f32 0.0, %v291
      %v293 = vpop.f32.mrb[0].mxu0
      %v294 = vpop.f32.mrb[0].mxu0
      %v295 = vpop.f32.mrb[0].mxu0
      %296 = vdwg.mxu0
      %v298 = vsel %vm202, %v173, 0
      %v301 = vsel %vm206, %v184, 0
      %v304 = vsel %vm206, %v192, 0
      %v307 = vsel %vm206, %v191, 0
      %309 = vmatprep.subr.bf16.mxu0 %v304
      %310 = vmatpush1.bf16.msra.mxu0 %v301
      %311 = vmatprep.subr.bf16.mxu0 0
      %312 = vmatpush1.bf16.msra.mxu0 0
      %313 = vmatprep.subr.bf16.mxu0 0
      %314 = vmatpush1.bf16.msra.mxu0 0
      %315 = vmatprep.subr.bf16.mxu0 0
      %316 = vmatpush1.bf16.msra.mxu0 0
      %317 = vmatprep.subr.bf16.mxu0 0
      %318 = vmatpush1.bf16.msra.mxu0 0
      %319 = vmatprep.subr.bf16.mxu0 0
      %320 = vmatpush1.bf16.msra.mxu0 0
      %321 = vmatprep.subr.bf16.mxu0 0
      %322 = vmatpush1.bf16.msra.mxu0 0
      %323 = vmatprep.subr.bf16.mxu0 0
      %324 = vmatpush1.bf16.msra.mxu0 0
      %325 = vmatprep.subr.bf16.mxu0 0
      %326 = vmatpush1.bf16.msra.mxu0 0
      %327 = vmatprep.subr.bf16.mxu0 0
      %328 = vmatpush1.bf16.msra.mxu0 0
      %329 = vmatprep.subr.bf16.mxu0 0
      %330 = vmatpush1.bf16.msra.mxu0 0
      %331 = vmatprep.subr.bf16.mxu0 0
      %332 = vmatpush1.bf16.msra.mxu0 0
      %333 = vmatprep.subr.bf16.mxu0 0
      %334 = vmatpush1.bf16.msra.mxu0 0
      %335 = vmatprep.subr.bf16.mxu0 0
      %336 = vmatpush1.bf16.msra.mxu0 0
      %337 = vmatprep.subr.bf16.mxu0 0
      %338 = vmatpush1.bf16.msra.mxu0 0
      %339 = vmatprep.subr.bf16.mxu0 0
      %340 = vmatpush1.bf16.msra.mxu0 0
      %341 = vmatprep.mubr.bf16.mxu0 0
      %342 = vmatmul.mubr.bf16.gmra.mrb[0].mxu0 %v298
      %v343 = vpop.f32.mrb[0].mxu0
      %v344 = vadd.f32 %v251, %v343
      %v345 = vpop.f32.mrb[0].mxu0
      %v346 = vadd.f32 %v253, %v345
      %v347 = vpop.f32.mrb[0].mxu0
      %v348 = vpop.f32.mrb[0].mxu0
      %349 = vdwg.mxu0
      %350 = vmatprep.subr.bf16.mxu0 0
      %351 = vmatpush1.bf16.msra.mxu0 %v307
      %352 = vmatprep.subr.bf16.mxu0 0
      %353 = vmatpush1.bf16.msra.mxu0 0
      %354 = vmatprep.subr.bf16.mxu0 0
      %355 = vmatpush1.bf16.msra.mxu0 0
      %356 = vmatprep.subr.bf16.mxu0 0
      %357 = vmatpush1.bf16.msra.mxu0 0
      %358 = vmatprep.subr.bf16.mxu0 0
      %359 = vmatpush1.bf16.msra.mxu0 0
      %360 = vmatprep.subr.bf16.mxu0 0
      %361 = vmatpush1.bf16.msra.mxu0 0
      %362 = vmatprep.subr.bf16.mxu0 0
      %363 = vmatpush1.bf16.msra.mxu0 0
      %364 = vmatprep.subr.bf16.mxu0 0
      %365 = vmatpush1.bf16.msra.mxu0 0
      %366 = vmatprep.subr.bf16.mxu0 0
      %367 = vmatpush1.bf16.msra.mxu0 0
      %368 = vmatprep.subr.bf16.mxu0 0
      %369 = vmatpush1.bf16.msra.mxu0 0
      %370 = vmatprep.subr.bf16.mxu0 0
      %371 = vmatpush1.bf16.msra.mxu0 0
      %372 = vmatprep.subr.bf16.mxu0 0
      %373 = vmatpush1.bf16.msra.mxu0 0
      %374 = vmatprep.subr.bf16.mxu0 0
      %375 = vmatpush1.bf16.msra.mxu0 0
      %376 = vmatprep.subr.bf16.mxu0 0
      %377 = vmatpush1.bf16.msra.mxu0 0
      %378 = vmatprep.subr.bf16.mxu0 0
      %379 = vmatpush1.bf16.msra.mxu0 0
      %380 = vmatprep.subr.bf16.mxu0 0
      %381 = vmatpush1.bf16.msra.mxu0 0
      %382 = vmatprep.mubr.bf16.mxu0 0
      %383 = vmatmul.mubr.bf16.gmra.mrb[0].mxu0 %v298
      %v384 = vpop.f32.mrb[0].mxu0
      %v385 = vadd.f32 %v292, %v384
      %v386 = vpop.f32.mrb[0].mxu0
      %v387 = vpop.f32.mrb[0].mxu0
      %v388 = vpop.f32.mrb[0].mxu0
      %389 = vdwg.mxu0
      %v390 = vld [vmem:[%s165] sm:$0x3f]
      %s391 = scalar_lea.vmem %s1, 8
      %v392 = vld [vmem:[%s391] sm:$0xf]
      %v394 = vcombine.high %v390, %v390
      %v396 = vunpack.c.l.s4 1983009808
      %v397 = vunpack.c.0.s8 %v396
      %v398 = vlaneseq
      %v399 = vshrl.u32 %v398, 7
      %v400 = vsub.s32 %v397, %v399
      %v401 = vrot.slane %v390, %v400
      %v403 = vunpack.c.l.s4 1983009808
      %v404 = vunpack.c.0.s8 %v403
      %v405 = vlaneseq
      %v406 = vshrl.u32 %v405, 7
      %v407 = vsub.s32 %v404, %v406
      %v408 = vrot.slane %v394, %v407
      %v409 = vcombine.high %v401, %v401
      %410 = vrot.lane.b32.xlu0 %v401, 126
      %v411 = vpop.permute.xlu0 %410
      %412 = vrot.lane.b32.xlu0 %v409, 126
      %v413 = vpop.permute.xlu0 %412
      %414 = vrot.lane.b32.xlu0 %v408, 126
      %v415 = vpop.permute.xlu0 %414
      %vm416 = vcmask 1031168
      %v417 = vsel %vm416, %v411, %v413
      %v418 = vsel %vm416, %v413, %v415
      %v420 = vsel %vm202, %v392, 0
      %v423 = vsel %vm206, %v417, 0
      %v426 = vsel %vm206, %v418, 0
      %v429 = vsel %vm206, %v415, 0
      %431 = vmatprep.subr.bf16.mxu0 %v426
      %432 = vmatpush1.bf16.msra.mxu0 %v423
      %433 = vmatprep.subr.bf16.mxu0 0
      %434 = vmatpush1.bf16.msra.mxu0 0
      %435 = vmatprep.subr.bf16.mxu0 0
      %436 = vmatpush1.bf16.msra.mxu0 0
      %437 = vmatprep.subr.bf16.mxu0 0
      %438 = vmatpush1.bf16.msra.mxu0 0
      %439 = vmatprep.subr.bf16.mxu0 0
      %440 = vmatpush1.bf16.msra.mxu0 0
      %441 = vmatprep.subr.bf16.mxu0 0
      %442 = vmatpush1.bf16.msra.mxu0 0
      %443 = vmatprep.subr.bf16.mxu0 0
      %444 = vmatpush1.bf16.msra.mxu0 0
      %445 = vmatprep.subr.bf16.mxu0 0
      %446 = vmatpush1.bf16.msra.mxu0 0
      %447 = vmatprep.subr.bf16.mxu0 0
      %448 = vmatpush1.bf16.msra.mxu0 0
      %449 = vmatprep.subr.bf16.mxu0 0
      %450 = vmatpush1.bf16.msra.mxu0 0
      %451 = vmatprep.subr.bf16.mxu0 0
      %452 = vmatpush1.bf16.msra.mxu0 0
      %453 = vmatprep.subr.bf16.mxu0 0
      %454 = vmatpush1.bf16.msra.mxu0 0
      %455 = vmatprep.subr.bf16.mxu0 0
      %456 = vmatpush1.bf16.msra.mxu0 0
      %457 = vmatprep.subr.bf16.mxu0 0
      %458 = vmatpush1.bf16.msra.mxu0 0
      %459 = vmatprep.subr.bf16.mxu0 0
      %460 = vmatpush1.bf16.msra.mxu0 0
      %461 = vmatprep.subr.bf16.mxu0 0
      %462 = vmatpush1.bf16.msra.mxu0 0
      %463 = vmatprep.mubr.bf16.mxu0 0
      %464 = vmatmul.mubr.bf16.gmra.mrb[0].mxu0 %v420
      %v465 = vpop.f32.mrb[0].mxu0
      %v466 = vadd.f32 0.0, %v465
      %v467 = vpop.f32.mrb[0].mxu0
      %v468 = vadd.f32 0.0, %v467
      %v469 = vpop.f32.mrb[0].mxu0
      %v470 = vpop.f32.mrb[0].mxu0
      %471 = vdwg.mxu0
      %472 = vmatprep.subr.bf16.mxu0 0
      %473 = vmatpush1.bf16.msra.mxu0 %v429
      %474 = vmatprep.subr.bf16.mxu0 0
      %475 = vmatpush1.bf16.msra.mxu0 0
      %476 = vmatprep.subr.bf16.mxu0 0
      %477 = vmatpush1.bf16.msra.mxu0 0
      %478 = vmatprep.subr.bf16.mxu0 0
      %479 = vmatpush1.bf16.msra.mxu0 0
      %480 = vmatprep.subr.bf16.mxu0 0
      %481 = vmatpush1.bf16.msra.mxu0 0
      %482 = vmatprep.subr.bf16.mxu0 0
      %483 = vmatpush1.bf16.msra.mxu0 0
      %484 = vmatprep.subr.bf16.mxu0 0
      %485 = vmatpush1.bf16.msra.mxu0 0
      %486 = vmatprep.subr.bf16.mxu0 0
      %487 = vmatpush1.bf16.msra.mxu0 0
      %488 = vmatprep.subr.bf16.mxu0 0
      %489 = vmatpush1.bf16.msra.mxu0 0
      %490 = vmatprep.subr.bf16.mxu0 0
      %491 = vmatpush1.bf16.msra.mxu0 0
      %492 = vmatprep.subr.bf16.mxu0 0
      %493 = vmatpush1.bf16.msra.mxu0 0
      %494 = vmatprep.subr.bf16.mxu0 0
      %495 = vmatpush1.bf16.msra.mxu0 0
      %496 = vmatprep.subr.bf16.mxu0 0
      %497 = vmatpush1.bf16.msra.mxu0 0
      %498 = vmatprep.subr.bf16.mxu0 0
      %499 = vmatpush1.bf16.msra.mxu0 0
      %500 = vmatprep.subr.bf16.mxu0 0
      %501 = vmatpush1.bf16.msra.mxu0 0
      %502 = vmatprep.subr.bf16.mxu0 0
      %503 = vmatpush1.bf16.msra.mxu0 0
      %504 = vmatprep.mubr.bf16.mxu0 0
      %505 = vmatmul.mubr.bf16.gmra.mrb[0].mxu0 %v420
      %v506 = vpop.f32.mrb[0].mxu0
      %v507 = vadd.f32 0.0, %v506
      %v508 = vpop.f32.mrb[0].mxu0
      %v509 = vpop.f32.mrb[0].mxu0
      %v510 = vpop.f32.mrb[0].mxu0
      %511 = vdwg.mxu0
      %v512 = vadd.f32 %v344, %v466
      %v513 = vadd.f32 %v346, %v468
      %v514 = vadd.f32 %v385, %v507
      %v515 = vld [vmem:[%s165] sm:$0x3f]
      %s516 = scalar_lea.vmem %s1, 12
      %v517 = vld [vmem:[%s516] sm:$0xf]
      %v519 = vcombine.high %v515, %v515
      %v521 = vunpack.c.l.s4 1983009808
      %v522 = vunpack.c.0.s8 %v521
      %v523 = vlaneseq
      %v524 = vshrl.u32 %v523, 7
      %v525 = vsub.s32 %v522, %v524
      %v526 = vrot.slane %v515, %v525
      %v528 = vunpack.c.l.s4 1983009808
      %v529 = vunpack.c.0.s8 %v528
      %v530 = vlaneseq
      %v531 = vshrl.u32 %v530, 7
      %v532 = vsub.s32 %v529, %v531
      %v533 = vrot.slane %v519, %v532
      %v534 = vcombine.high %v526, %v526
      %535 = vrot.lane.b32.xlu0 %v526, 110
      %v536 = vpop.permute.xlu0 %535
      %537 = vrot.lane.b32.xlu0 %v534, 110
      %v538 = vpop.permute.xlu0 %537
      %539 = vrot.lane.b32.xlu0 %v533, 110
      %v540 = vpop.permute.xlu0 %539
      %vm541 = vcmask 900096
      %v542 = vsel %vm541, %v536, %v538
      %v543 = vsel %vm541, %v538, %v540
      %v545 = vsel %vm202, %v517, 0
      %v548 = vsel %vm206, %v542, 0
      %v551 = vsel %vm206, %v543, 0
      %v554 = vsel %vm206, %v540, 0
      %556 = vmatprep.subr.bf16.mxu0 %v551
      %557 = vmatpush1.bf16.msra.mxu0 %v548
      %558 = vmatprep.subr.bf16.mxu0 0
      %559 = vmatpush1.bf16.msra.mxu0 0
      %560 = vmatprep.subr.bf16.mxu0 0
      %561 = vmatpush1.bf16.msra.mxu0 0
      %562 = vmatprep.subr.bf16.mxu0 0
      %563 = vmatpush1.bf16.msra.mxu0 0
      %564 = vmatprep.subr.bf16.mxu0 0
      %565 = vmatpush1.bf16.msra.mxu0 0
      %566 = vmatprep.subr.bf16.mxu0 0
      %567 = vmatpush1.bf16.msra.mxu0 0
      %568 = vmatprep.subr.bf16.mxu0 0
      %569 = vmatpush1.bf16.msra.mxu0 0
      %570 = vmatprep.subr.bf16.mxu0 0
      %571 = vmatpush1.bf16.msra.mxu0 0
      %572 = vmatprep.subr.bf16.mxu0 0
      %573 = vmatpush1.bf16.msra.mxu0 0
      %574 = vmatprep.subr.bf16.mxu0 0
      %575 = vmatpush1.bf16.msra.mxu0 0
      %576 = vmatprep.subr.bf16.mxu0 0
      %577 = vmatpush1.bf16.msra.mxu0 0
      %578 = vmatprep.subr.bf16.mxu0 0
      %579 = vmatpush1.bf16.msra.mxu0 0
      %580 = vmatprep.subr.bf16.mxu0 0
      %581 = vmatpush1.bf16.msra.mxu0 0
      %582 = vmatprep.subr.bf16.mxu0 0
      %583 = vmatpush1.bf16.msra.mxu0 0
      %584 = vmatprep.subr.bf16.mxu0 0
      %585 = vmatpush1.bf16.msra.mxu0 0
      %586 = vmatprep.subr.bf16.mxu0 0
      %587 = vmatpush1.bf16.msra.mxu0 0
      %588 = vmatprep.mubr.bf16.mxu0 0
      %589 = vmatmul.mubr.bf16.gmra.mrb[0].mxu0 %v545
      %v590 = vpop.f32.mrb[0].mxu0
      %v591 = vadd.f32 0.0, %v590
      %v592 = vpop.f32.mrb[0].mxu0
      %v593 = vadd.f32 0.0, %v592
      %v594 = vpop.f32.mrb[0].mxu0
      %v595 = vpop.f32.mrb[0].mxu0
      %596 = vdwg.mxu0
      %597 = vmatprep.subr.bf16.mxu0 0
      %598 = vmatpush1.bf16.msra.mxu0 %v554
      %599 = vmatprep.subr.bf16.mxu0 0
      %600 = vmatpush1.bf16.msra.mxu0 0
      %601 = vmatprep.subr.bf16.mxu0 0
      %602 = vmatpush1.bf16.msra.mxu0 0
      %603 = vmatprep.subr.bf16.mxu0 0
      %604 = vmatpush1.bf16.msra.mxu0 0
      %605 = vmatprep.subr.bf16.mxu0 0
      %606 = vmatpush1.bf16.msra.mxu0 0
      %607 = vmatprep.subr.bf16.mxu0 0
      %608 = vmatpush1.bf16.msra.mxu0 0
      %609 = vmatprep.subr.bf16.mxu0 0
      %610 = vmatpush1.bf16.msra.mxu0 0
      %611 = vmatprep.subr.bf16.mxu0 0
      %612 = vmatpush1.bf16.msra.mxu0 0
      %613 = vmatprep.subr.bf16.mxu0 0
      %614 = vmatpush1.bf16.msra.mxu0 0
      %615 = vmatprep.subr.bf16.mxu0 0
      %616 = vmatpush1.bf16.msra.mxu0 0
      %617 = vmatprep.subr.bf16.mxu0 0
      %618 = vmatpush1.bf16.msra.mxu0 0
      %619 = vmatprep.subr.bf16.mxu0 0
      %620 = vmatpush1.bf16.msra.mxu0 0
      %621 = vmatprep.subr.bf16.mxu0 0
      %622 = vmatpush1.bf16.msra.mxu0 0
      %623 = vmatprep.subr.bf16.mxu0 0
      %624 = vmatpush1.bf16.msra.mxu0 0
      %625 = vmatprep.subr.bf16.mxu0 0
      %626 = vmatpush1.bf16.msra.mxu0 0
      %627 = vmatprep.subr.bf16.mxu0 0
      %628 = vmatpush1.bf16.msra.mxu0 0
      %629 = vmatprep.mubr.bf16.mxu0 0
      %630 = vmatmul.mubr.bf16.gmra.mrb[0].mxu0 %v545
      %v631 = vpop.f32.mrb[0].mxu0
      %v632 = vadd.f32 0.0, %v631
      %v633 = vpop.f32.mrb[0].mxu0
      %v634 = vpop.f32.mrb[0].mxu0
      %v635 = vpop.f32.mrb[0].mxu0
      %636 = vdwg.mxu0
      %v637 = vadd.f32 %v512, %v591
      %v638 = vadd.f32 %v513, %v593
      %v639 = vadd.f32 %v514, %v632
      %v640 = vld [vmem:[%s165] sm:$0x3f]
      %s641 = scalar_lea.vmem %s1, 16
      %v642 = vld [vmem:[%s641] sm:$0xf]
      %v644 = vcombine.high %v640, %v640
      %v646 = vunpack.c.l.s4 1983009808
      %v647 = vunpack.c.0.s8 %v646
      %v648 = vlaneseq
      %v649 = vshrl.u32 %v648, 7
      %v650 = vsub.s32 %v647, %v649
      %v651 = vrot.slane %v640, %v650
      %v653 = vunpack.c.l.s4 1983009808
      %v654 = vunpack.c.0.s8 %v653
      %v655 = vlaneseq
      %v656 = vshrl.u32 %v655, 7
      %v657 = vsub.s32 %v654, %v656
      %v658 = vrot.slane %v644, %v657
      %v659 = vcombine.high %v651, %v651
      %660 = vrot.lane.b32.xlu0 %v651, 109
      %v661 = vpop.permute.xlu0 %660
      %662 = vrot.lane.b32.xlu0 %v659, 109
      %v663 = vpop.permute.xlu0 %662
      %664 = vrot.lane.b32.xlu0 %v658, 109
      %v665 = vpop.permute.xlu0 %664
      %vm666 = vcmask 891904
      %v667 = vsel %vm666, %v661, %v663
      %v668 = vsel %vm666, %v663, %v665
      %v670 = vsel %vm202, %v642, 0
      %v673 = vsel %vm206, %v667, 0
      %v676 = vsel %vm206, %v668, 0
      %v679 = vsel %vm206, %v665, 0
      %681 = vmatprep.subr.bf16.mxu0 %v676
      %682 = vmatpush1.bf16.msra.mxu0 %v673
      %683 = vmatprep.subr.bf16.mxu0 0
      %684 = vmatpush1.bf16.msra.mxu0 0
      %685 = vmatprep.subr.bf16.mxu0 0
      %686 = vmatpush1.bf16.msra.mxu0 0
      %687 = vmatprep.subr.bf16.mxu0 0
      %688 = vmatpush1.bf16.msra.mxu0 0
      %689 = vmatprep.subr.bf16.mxu0 0
      %690 = vmatpush1.bf16.msra.mxu0 0
      %691 = vmatprep.subr.bf16.mxu0 0
      %692 = vmatpush1.bf16.msra.mxu0 0
      %693 = vmatprep.subr.bf16.mxu0 0
      %694 = vmatpush1.bf16.msra.mxu0 0
      %695 = vmatprep.subr.bf16.mxu0 0
      %696 = vmatpush1.bf16.msra.mxu0 0
      %697 = vmatprep.subr.bf16.mxu0 0
      %698 = vmatpush1.bf16.msra.mxu0 0
      %699 = vmatprep.subr.bf16.mxu0 0
      %700 = vmatpush1.bf16.msra.mxu0 0
      %701 = vmatprep.subr.bf16.mxu0 0
      %702 = vmatpush1.bf16.msra.mxu0 0
      %703 = vmatprep.subr.bf16.mxu0 0
      %704 = vmatpush1.bf16.msra.mxu0 0
      %705 = vmatprep.subr.bf16.mxu0 0
      %706 = vmatpush1.bf16.msra.mxu0 0
      %707 = vmatprep.subr.bf16.mxu0 0
      %708 = vmatpush1.bf16.msra.mxu0 0
      %709 = vmatprep.subr.bf16.mxu0 0
      %710 = vmatpush1.bf16.msra.mxu0 0
      %711 = vmatprep.subr.bf16.mxu0 0
      %712 = vmatpush1.bf16.msra.mxu0 0
      %713 = vmatprep.mubr.bf16.mxu0 0
      %714 = vmatmul.mubr.bf16.gmra.mrb[0].mxu0 %v670
      %v715 = vpop.f32.mrb[0].mxu0
      %v716 = vadd.f32 0.0, %v715
      %v717 = vpop.f32.mrb[0].mxu0
      %v718 = vadd.f32 0.0, %v717
      %v719 = vpop.f32.mrb[0].mxu0
      %v720 = vpop.f32.mrb[0].mxu0
      %721 = vdwg.mxu0
      %722 = vmatprep.subr.bf16.mxu0 0
      %723 = vmatpush1.bf16.msra.mxu0 %v679
      %724 = vmatprep.subr.bf16.mxu0 0
      %725 = vmatpush1.bf16.msra.mxu0 0
      %726 = vmatprep.subr.bf16.mxu0 0
      %727 = vmatpush1.bf16.msra.mxu0 0
      %728 = vmatprep.subr.bf16.mxu0 0
      %729 = vmatpush1.bf16.msra.mxu0 0
      %730 = vmatprep.subr.bf16.mxu0 0
      %731 = vmatpush1.bf16.msra.mxu0 0
      %732 = vmatprep.subr.bf16.mxu0 0
      %733 = vmatpush1.bf16.msra.mxu0 0
      %734 = vmatprep.subr.bf16.mxu0 0
      %735 = vmatpush1.bf16.msra.mxu0 0
      %736 = vmatprep.subr.bf16.mxu0 0
      %737 = vmatpush1.bf16.msra.mxu0 0
      %738 = vmatprep.subr.bf16.mxu0 0
      %739 = vmatpush1.bf16.msra.mxu0 0
      %740 = vmatprep.subr.bf16.mxu0 0
      %741 = vmatpush1.bf16.msra.mxu0 0
      %742 = vmatprep.subr.bf16.mxu0 0
      %743 = vmatpush1.bf16.msra.mxu0 0
      %744 = vmatprep.subr.bf16.mxu0 0
      %745 = vmatpush1.bf16.msra.mxu0 0
      %746 = vmatprep.subr.bf16.mxu0 0
      %747 = vmatpush1.bf16.msra.mxu0 0
      %748 = vmatprep.subr.bf16.mxu0 0
      %749 = vmatpush1.bf16.msra.mxu0 0
      %750 = vmatprep.subr.bf16.mxu0 0
      %751 = vmatpush1.bf16.msra.mxu0 0
      %752 = vmatprep.subr.bf16.mxu0 0
      %753 = vmatpush1.bf16.msra.mxu0 0
      %754 = vmatprep.mubr.bf16.mxu0 0
      %755 = vmatmul.mubr.bf16.gmra.mrb[0].mxu0 %v670
      %v756 = vpop.f32.mrb[0].mxu0
      %v757 = vadd.f32 0.0, %v756
      %v758 = vpop.f32.mrb[0].mxu0
      %v759 = vpop.f32.mrb[0].mxu0
      %v760 = vpop.f32.mrb[0].mxu0
      %761 = vdwg.mxu0
      %v762 = vadd.f32 %v637, %v716
      %v763 = vadd.f32 %v638, %v718
      %v764 = vadd.f32 %v639, %v757
      %v765 = vld [vmem:[%s165] sm:$0x3f]
      %s766 = scalar_lea.vmem %s1, 20
      %v767 = vld [vmem:[%s766] sm:$0xf]
      %v769 = vcombine.high %v765, %v765
      %v771 = vunpack.c.l.s4 1983009808
      %v772 = vunpack.c.0.s8 %v771
      %v773 = vlaneseq
      %v774 = vshrl.u32 %v773, 7
      %v775 = vsub.s32 %v772, %v774
      %v776 = vrot.slane %v765, %v775
      %v778 = vunpack.c.l.s4 1983009808
      %v779 = vunpack.c.0.s8 %v778
      %v780 = vlaneseq
      %v781 = vshrl.u32 %v780, 7
      %v782 = vsub.s32 %v779, %v781
      %v783 = vrot.slane %v769, %v782
      %v784 = vcombine.high %v776, %v776
      %785 = vrot.lane.b32.xlu0 %v776, 108
      %v786 = vpop.permute.xlu0 %785
      %787 = vrot.lane.b32.xlu0 %v784, 108
      %v788 = vpop.permute.xlu0 %787
      %789 = vrot.lane.b32.xlu0 %v783, 108
      %v790 = vpop.permute.xlu0 %789
      %vm791 = vcmask 883712
      %v792 = vsel %vm791, %v786, %v788
      %v793 = vsel %vm791, %v788, %v790
      %v795 = vsel %vm202, %v767, 0
      %v798 = vsel %vm206, %v792, 0
      %v801 = vsel %vm206, %v793, 0
      %v804 = vsel %vm206, %v790, 0
      %806 = vmatprep.subr.bf16.mxu0 %v801
      %807 = vmatpush1.bf16.msra.mxu0 %v798
      %808 = vmatprep.subr.bf16.mxu0 0
      %809 = vmatpush1.bf16.msra.mxu0 0
      %810 = vmatprep.subr.bf16.mxu0 0
      %811 = vmatpush1.bf16.msra.mxu0 0
      %812 = vmatprep.subr.bf16.mxu0 0
      %813 = vmatpush1.bf16.msra.mxu0 0
      %814 = vmatprep.subr.bf16.mxu0 0
      %815 = vmatpush1.bf16.msra.mxu0 0
      %816 = vmatprep.subr.bf16.mxu0 0
      %817 = vmatpush1.bf16.msra.mxu0 0
      %818 = vmatprep.subr.bf16.mxu0 0
      %819 = vmatpush1.bf16.msra.mxu0 0
      %820 = vmatprep.subr.bf16.mxu0 0
      %821 = vmatpush1.bf16.msra.mxu0 0
      %822 = vmatprep.subr.bf16.mxu0 0
      %823 = vmatpush1.bf16.msra.mxu0 0
      %824 = vmatprep.subr.bf16.mxu0 0
      %825 = vmatpush1.bf16.msra.mxu0 0
      %826 = vmatprep.subr.bf16.mxu0 0
      %827 = vmatpush1.bf16.msra.mxu0 0
      %828 = vmatprep.subr.bf16.mxu0 0
      %829 = vmatpush1.bf16.msra.mxu0 0
      %830 = vmatprep.subr.bf16.mxu0 0
      %831 = vmatpush1.bf16.msra.mxu0 0
      %832 = vmatprep.subr.bf16.mxu0 0
      %833 = vmatpush1.bf16.msra.mxu0 0
      %834 = vmatprep.subr.bf16.mxu0 0
      %835 = vmatpush1.bf16.msra.mxu0 0
      %836 = vmatprep.subr.bf16.mxu0 0
      %837 = vmatpush1.bf16.msra.mxu0 0
      %838 = vmatprep.mubr.bf16.mxu0 0
      %839 = vmatmul.mubr.bf16.gmra.mrb[0].mxu0 %v795
      %v840 = vpop.f32.mrb[0].mxu0
      %v841 = vadd.f32 0.0, %v840
      %v842 = vpop.f32.mrb[0].mxu0
      %v843 = vadd.f32 0.0, %v842
      %v844 = vpop.f32.mrb[0].mxu0
      %v845 = vpop.f32.mrb[0].mxu0
      %846 = vdwg.mxu0
      %847 = vmatprep.subr.bf16.mxu0 0
      %848 = vmatpush1.bf16.msra.mxu0 %v804
      %849 = vmatprep.subr.bf16.mxu0 0
      %850 = vmatpush1.bf16.msra.mxu0 0
      %851 = vmatprep.subr.bf16.mxu0 0
      %852 = vmatpush1.bf16.msra.mxu0 0
      %853 = vmatprep.subr.bf16.mxu0 0
      %854 = vmatpush1.bf16.msra.mxu0 0
      %855 = vmatprep.subr.bf16.mxu0 0
      %856 = vmatpush1.bf16.msra.mxu0 0
      %857 = vmatprep.subr.bf16.mxu0 0
      %858 = vmatpush1.bf16.msra.mxu0 0
      %859 = vmatprep.subr.bf16.mxu0 0
      %860 = vmatpush1.bf16.msra.mxu0 0
      %861 = vmatprep.subr.bf16.mxu0 0
      %862 = vmatpush1.bf16.msra.mxu0 0
      %863 = vmatprep.subr.bf16.mxu0 0
      %864 = vmatpush1.bf16.msra.mxu0 0
      %865 = vmatprep.subr.bf16.mxu0 0
      %866 = vmatpush1.bf16.msra.mxu0 0
      %867 = vmatprep.subr.bf16.mxu0 0
      %868 = vmatpush1.bf16.msra.mxu0 0
      %869 = vmatprep.subr.bf16.mxu0 0
      %870 = vmatpush1.bf16.msra.mxu0 0
      %871 = vmatprep.subr.bf16.mxu0 0
      %872 = vmatpush1.bf16.msra.mxu0 0
      %873 = vmatprep.subr.bf16.mxu0 0
      %874 = vmatpush1.bf16.msra.mxu0 0
      %875 = vmatprep.subr.bf16.mxu0 0
      %876 = vmatpush1.bf16.msra.mxu0 0
      %877 = vmatprep.subr.bf16.mxu0 0
      %878 = vmatpush1.bf16.msra.mxu0 0
      %879 = vmatprep.mubr.bf16.mxu0 0
      %880 = vmatmul.mubr.bf16.gmra.mrb[0].mxu0 %v795
      %v881 = vpop.f32.mrb[0].mxu0
      %v882 = vadd.f32 0.0, %v881
      %v883 = vpop.f32.mrb[0].mxu0
      %v884 = vpop.f32.mrb[0].mxu0
      %v885 = vpop.f32.mrb[0].mxu0
      %886 = vdwg.mxu0
      %v887 = vadd.f32 %v762, %v841
      %v888 = vadd.f32 %v763, %v843
      %v889 = vadd.f32 %v764, %v882
      %v890 = vld [vmem:[%s165] sm:$0x3f]
      %s891 = scalar_lea.vmem %s1, 24
      %v892 = vld [vmem:[%s891] sm:$0xf]
      %v894 = vcombine.high %v890, %v890
      %v896 = vunpack.c.l.s4 1983009808
      %v897 = vunpack.c.0.s8 %v896
      %v898 = vlaneseq
      %v899 = vshrl.u32 %v898, 7
      %v900 = vsub.s32 %v897, %v899
      %v901 = vrot.slane %v890, %v900
      %v903 = vunpack.c.l.s4 1983009808
      %v904 = vunpack.c.0.s8 %v903
      %v905 = vlaneseq
      %v906 = vshrl.u32 %v905, 7
      %v907 = vsub.s32 %v904, %v906
      %v908 = vrot.slane %v894, %v907
      %v909 = vcombine.high %v901, %v901
      %910 = vrot.lane.b32.xlu0 %v901, 92
      %v911 = vpop.permute.xlu0 %910
      %912 = vrot.lane.b32.xlu0 %v909, 92
      %v913 = vpop.permute.xlu0 %912
      %914 = vrot.lane.b32.xlu0 %v908, 92
      %v915 = vpop.permute.xlu0 %914
      %vm916 = vcmask 752640
      %v917 = vsel %vm916, %v911, %v913
      %v918 = vsel %vm916, %v913, %v915
      %v920 = vsel %vm202, %v892, 0
      %v923 = vsel %vm206, %v917, 0
      %v926 = vsel %vm206, %v918, 0
      %v929 = vsel %vm206, %v915, 0
      %931 = vmatprep.subr.bf16.mxu0 %v926
      %932 = vmatpush1.bf16.msra.mxu0 %v923
      %933 = vmatprep.subr.bf16.mxu0 0
      %934 = vmatpush1.bf16.msra.mxu0 0
      %935 = vmatprep.subr.bf16.mxu0 0
      %936 = vmatpush1.bf16.msra.mxu0 0
      %937 = vmatprep.subr.bf16.mxu0 0
      %938 = vmatpush1.bf16.msra.mxu0 0
      %939 = vmatprep.subr.bf16.mxu0 0
      %940 = vmatpush1.bf16.msra.mxu0 0
      %941 = vmatprep.subr.bf16.mxu0 0
      %942 = vmatpush1.bf16.msra.mxu0 0
      %943 = vmatprep.subr.bf16.mxu0 0
      %944 = vmatpush1.bf16.msra.mxu0 0
      %945 = vmatprep.subr.bf16.mxu0 0
      %946 = vmatpush1.bf16.msra.mxu0 0
      %947 = vmatprep.subr.bf16.mxu0 0
      %948 = vmatpush1.bf16.msra.mxu0 0
      %949 = vmatprep.subr.bf16.mxu0 0
      %950 = vmatpush1.bf16.msra.mxu0 0
      %951 = vmatprep.subr.bf16.mxu0 0
      %952 = vmatpush1.bf16.msra.mxu0 0
      %953 = vmatprep.subr.bf16.mxu0 0
      %954 = vmatpush1.bf16.msra.mxu0 0
      %955 = vmatprep.subr.bf16.mxu0 0
      %956 = vmatpush1.bf16.msra.mxu0 0
      %957 = vmatprep.subr.bf16.mxu0 0
      %958 = vmatpush1.bf16.msra.mxu0 0
      %959 = vmatprep.subr.bf16.mxu0 0
      %960 = vmatpush1.bf16.msra.mxu0 0
      %961 = vmatprep.subr.bf16.mxu0 0
      %962 = vmatpush1.bf16.msra.mxu0 0
      %963 = vmatprep.mubr.bf16.mxu0 0
      %964 = vmatmul.mubr.bf16.gmra.mrb[0].mxu0 %v920
      %v965 = vpop.f32.mrb[0].mxu0
      %v966 = vadd.f32 0.0, %v965
      %v967 = vpop.f32.mrb[0].mxu0
      %v968 = vadd.f32 0.0, %v967
      %v969 = vpop.f32.mrb[0].mxu0
      %v970 = vpop.f32.mrb[0].mxu0
      %971 = vdwg.mxu0
      %972 = vmatprep.subr.bf16.mxu0 0
      %973 = vmatpush1.bf16.msra.mxu0 %v929
      %974 = vmatprep.subr.bf16.mxu0 0
      %975 = vmatpush1.bf16.msra.mxu0 0
      %976 = vmatprep.subr.bf16.mxu0 0
      %977 = vmatpush1.bf16.msra.mxu0 0
      %978 = vmatprep.subr.bf16.mxu0 0
      %979 = vmatpush1.bf16.msra.mxu0 0
      %980 = vmatprep.subr.bf16.mxu0 0
      %981 = vmatpush1.bf16.msra.mxu0 0
      %982 = vmatprep.subr.bf16.mxu0 0
      %983 = vmatpush1.bf16.msra.mxu0 0
      %984 = vmatprep.subr.bf16.mxu0 0
      %985 = vmatpush1.bf16.msra.mxu0 0
      %986 = vmatprep.subr.bf16.mxu0 0
      %987 = vmatpush1.bf16.msra.mxu0 0
      %988 = vmatprep.subr.bf16.mxu0 0
      %989 = vmatpush1.bf16.msra.mxu0 0
      %990 = vmatprep.subr.bf16.mxu0 0
      %991 = vmatpush1.bf16.msra.mxu0 0
      %992 = vmatprep.subr.bf16.mxu0 0
      %993 = vmatpush1.bf16.msra.mxu0 0
      %994 = vmatprep.subr.bf16.mxu0 0
      %995 = vmatpush1.bf16.msra.mxu0 0
      %996 = vmatprep.subr.bf16.mxu0 0
      %997 = vmatpush1.bf16.msra.mxu0 0
      %998 = vmatprep.subr.bf16.mxu0 0
      %999 = vmatpush1.bf16.msra.mxu0 0
      %1000 = vmatprep.subr.bf16.mxu0 0
      %1001 = vmatpush1.bf16.msra.mxu0 0
      %1002 = vmatprep.subr.bf16.mxu0 0
      %1003 = vmatpush1.bf16.msra.mxu0 0
      %1004 = vmatprep.mubr.bf16.mxu0 0
      %1005 = vmatmul.mubr.bf16.gmra.mrb[0].mxu0 %v920
      %v1006 = vpop.f32.mrb[0].mxu0
      %v1007 = vadd.f32 0.0, %v1006
      %v1008 = vpop.f32.mrb[0].mxu0
      %v1009 = vpop.f32.mrb[0].mxu0
      %v1010 = vpop.f32.mrb[0].mxu0
      %1011 = vdwg.mxu0
      %v1012 = vadd.f32 %v887, %v966
      %v1013 = vadd.f32 %v888, %v968
      %v1014 = vadd.f32 %v889, %v1007
      %v1015 = vld [vmem:[%s165] sm:$0x3f]
      %s1016 = scalar_lea.vmem %s1, 28
      %v1017 = vld [vmem:[%s1016] sm:$0xf]
      %v1019 = vcombine.high %v1015, %v1015
      %v1021 = vunpack.c.l.s4 1983009808
      %v1022 = vunpack.c.0.s8 %v1021
      %v1023 = vlaneseq
      %v1024 = vshrl.u32 %v1023, 7
      %v1025 = vsub.s32 %v1022, %v1024
      %v1026 = vrot.slane %v1015, %v1025
      %v1028 = vunpack.c.l.s4 1983009808
      %v1029 = vunpack.c.0.s8 %v1028
      %v1030 = vlaneseq
      %v1031 = vshrl.u32 %v1030, 7
      %v1032 = vsub.s32 %v1029, %v1031
      %v1033 = vrot.slane %v1019, %v1032
      %v1034 = vcombine.high %v1026, %v1026
      %1035 = vrot.lane.b32.xlu0 %v1026, 91
      %v1036 = vpop.permute.xlu0 %1035
      %1037 = vrot.lane.b32.xlu0 %v1034, 91
      %v1038 = vpop.permute.xlu0 %1037
      %1039 = vrot.lane.b32.xlu0 %v1033, 91
      %v1040 = vpop.permute.xlu0 %1039
      %vm1041 = vcmask 744448
      %v1042 = vsel %vm1041, %v1036, %v1038
      %v1043 = vsel %vm1041, %v1038, %v1040
      %v1045 = vsel %vm202, %v1017, 0
      %v1048 = vsel %vm206, %v1042, 0
      %v1051 = vsel %vm206, %v1043, 0
      %v1054 = vsel %vm206, %v1040, 0
      %1056 = vmatprep.subr.bf16.mxu0 %v1051
      %1057 = vmatpush1.bf16.msra.mxu0 %v1048
      %1058 = vmatprep.subr.bf16.mxu0 0
      %1059 = vmatpush1.bf16.msra.mxu0 0
      %1060 = vmatprep.subr.bf16.mxu0 0
      %1061 = vmatpush1.bf16.msra.mxu0 0
      %1062 = vmatprep.subr.bf16.mxu0 0
      %1063 = vmatpush1.bf16.msra.mxu0 0
      %1064 = vmatprep.subr.bf16.mxu0 0
      %1065 = vmatpush1.bf16.msra.mxu0 0
      %1066 = vmatprep.subr.bf16.mxu0 0
      %1067 = vmatpush1.bf16.msra.mxu0 0
      %1068 = vmatprep.subr.bf16.mxu0 0
      %1069 = vmatpush1.bf16.msra.mxu0 0
      %1070 = vmatprep.subr.bf16.mxu0 0
      %1071 = vmatpush1.bf16.msra.mxu0 0
      %1072 = vmatprep.subr.bf16.mxu0 0
      %1073 = vmatpush1.bf16.msra.mxu0 0
      %1074 = vmatprep.subr.bf16.mxu0 0
      %1075 = vmatpush1.bf16.msra.mxu0 0
      %1076 = vmatprep.subr.bf16.mxu0 0
      %1077 = vmatpush1.bf16.msra.mxu0 0
      %1078 = vmatprep.subr.bf16.mxu0 0
      %1079 = vmatpush1.bf16.msra.mxu0 0
      %1080 = vmatprep.subr.bf16.mxu0 0
      %1081 = vmatpush1.bf16.msra.mxu0 0
      %1082 = vmatprep.subr.bf16.mxu0 0
      %1083 = vmatpush1.bf16.msra.mxu0 0
      %1084 = vmatprep.subr.bf16.mxu0 0
      %1085 = vmatpush1.bf16.msra.mxu0 0
      %1086 = vmatprep.subr.bf16.mxu0 0
      %1087 = vmatpush1.bf16.msra.mxu0 0
      %1088 = vmatprep.mubr.bf16.mxu0 0
      %1089 = vmatmul.mubr.bf16.gmra.mrb[0].mxu0 %v1045
      %v1090 = vpop.f32.mrb[0].mxu0
      %v1091 = vadd.f32 0.0, %v1090
      %v1092 = vpop.f32.mrb[0].mxu0
      %v1093 = vadd.f32 0.0, %v1092
      %v1094 = vpop.f32.mrb[0].mxu0
      %v1095 = vpop.f32.mrb[0].mxu0
      %1096 = vdwg.mxu0
      %1097 = vmatprep.subr.bf16.mxu0 0
      %1098 = vmatpush1.bf16.msra.mxu0 %v1054
      %1099 = vmatprep.subr.bf16.mxu0 0
      %1100 = vmatpush1.bf16.msra.mxu0 0
      %1101 = vmatprep.subr.bf16.mxu0 0
      %1102 = vmatpush1.bf16.msra.mxu0 0
      %1103 = vmatprep.subr.bf16.mxu0 0
      %1104 = vmatpush1.bf16.msra.mxu0 0
      %1105 = vmatprep.subr.bf16.mxu0 0
      %1106 = vmatpush1.bf16.msra.mxu0 0
      %1107 = vmatprep.subr.bf16.mxu0 0
      %1108 = vmatpush1.bf16.msra.mxu0 0
      %1109 = vmatprep.subr.bf16.mxu0 0
      %1110 = vmatpush1.bf16.msra.mxu0 0
      %1111 = vmatprep.subr.bf16.mxu0 0
      %1112 = vmatpush1.bf16.msra.mxu0 0
      %1113 = vmatprep.subr.bf16.mxu0 0
      %1114 = vmatpush1.bf16.msra.mxu0 0
      %1115 = vmatprep.subr.bf16.mxu0 0
      %1116 = vmatpush1.bf16.msra.mxu0 0
      %1117 = vmatprep.subr.bf16.mxu0 0
      %1118 = vmatpush1.bf16.msra.mxu0 0
      %1119 = vmatprep.subr.bf16.mxu0 0
      %1120 = vmatpush1.bf16.msra.mxu0 0
      %1121 = vmatprep.subr.bf16.mxu0 0
      %1122 = vmatpush1.bf16.msra.mxu0 0
      %1123 = vmatprep.subr.bf16.mxu0 0
      %1124 = vmatpush1.bf16.msra.mxu0 0
      %1125 = vmatprep.subr.bf16.mxu0 0
      %1126 = vmatpush1.bf16.msra.mxu0 0
      %1127 = vmatprep.subr.bf16.mxu0 0
      %1128 = vmatpush1.bf16.msra.mxu0 0
      %1129 = vmatprep.mubr.bf16.mxu0 0
      %1130 = vmatmul.mubr.bf16.gmra.mrb[0].mxu0 %v1045
      %v1131 = vpop.f32.mrb[0].mxu0
      %v1132 = vadd.f32 0.0, %v1131
      %v1133 = vpop.f32.mrb[0].mxu0
      %v1134 = vpop.f32.mrb[0].mxu0
      %v1135 = vpop.f32.mrb[0].mxu0
      %1136 = vdwg.mxu0
      %v1137 = vadd.f32 %v1012, %v1091
      %v1138 = vadd.f32 %v1013, %v1093
      %v1139 = vadd.f32 %v1014, %v1132
      %v1140 = vld [vmem:[%s165] sm:$0x3f]
      %s1141 = scalar_lea.vmem %s1, 32
      %v1142 = vld [vmem:[%s1141] sm:$0xf]
      %v1144 = vcombine.high %v1140, %v1140
      %v1146 = vunpack.c.l.s4 1983009808
      %v1147 = vunpack.c.0.s8 %v1146
      %v1148 = vlaneseq
      %v1149 = vshrl.u32 %v1148, 7
      %v1150 = vsub.s32 %v1147, %v1149
      %v1151 = vrot.slane %v1140, %v1150
      %v1153 = vunpack.c.l.s4 1983009808
      %v1154 = vunpack.c.0.s8 %v1153
      %v1155 = vlaneseq
      %v1156 = vshrl.u32 %v1155, 7
      %v1157 = vsub.s32 %v1154, %v1156
      %v1158 = vrot.slane %v1144, %v1157
      %v1159 = vcombine.high %v1151, %v1151
      %1160 = vrot.lane.b32.xlu0 %v1151, 90
      %v1161 = vpop.permute.xlu0 %1160
      %1162 = vrot.lane.b32.xlu0 %v1159, 90
      %v1163 = vpop.permute.xlu0 %1162
      %1164 = vrot.lane.b32.xlu0 %v1158, 90
      %v1165 = vpop.permute.xlu0 %1164
      %vm1166 = vcmask 736256
      %v1167 = vsel %vm1166, %v1161, %v1163
      %v1168 = vsel %vm1166, %v1163, %v1165
      %v1170 = vsel %vm202, %v1142, 0
      %v1173 = vsel %vm206, %v1167, 0
      %v1176 = vsel %vm206, %v1168, 0
      %v1179 = vsel %vm206, %v1165, 0
      %1181 = vmatprep.subr.bf16.mxu0 %v1176
      %1182 = vmatpush1.bf16.msra.mxu0 %v1173
      %1183 = vmatprep.subr.bf16.mxu0 0
      %1184 = vmatpush1.bf16.msra.mxu0 0
      %1185 = vmatprep.subr.bf16.mxu0 0
      %1186 = vmatpush1.bf16.msra.mxu0 0
      %1187 = vmatprep.subr.bf16.mxu0 0
      %1188 = vmatpush1.bf16.msra.mxu0 0
      %1189 = vmatprep.subr.bf16.mxu0 0
      %1190 = vmatpush1.bf16.msra.mxu0 0
      %1191 = vmatprep.subr.bf16.mxu0 0
      %1192 = vmatpush1.bf16.msra.mxu0 0
      %1193 = vmatprep.subr.bf16.mxu0 0
      %1194 = vmatpush1.bf16.msra.mxu0 0
      %1195 = vmatprep.subr.bf16.mxu0 0
      %1196 = vmatpush1.bf16.msra.mxu0 0
      %1197 = vmatprep.subr.bf16.mxu0 0
      %1198 = vmatpush1.bf16.msra.mxu0 0
      %1199 = vmatprep.subr.bf16.mxu0 0
      %1200 = vmatpush1.bf16.msra.mxu0 0
      %1201 = vmatprep.subr.bf16.mxu0 0
      %1202 = vmatpush1.bf16.msra.mxu0 0
      %1203 = vmatprep.subr.bf16.mxu0 0
      %1204 = vmatpush1.bf16.msra.mxu0 0
      %1205 = vmatprep.subr.bf16.mxu0 0
      %1206 = vmatpush1.bf16.msra.mxu0 0
      %1207 = vmatprep.subr.bf16.mxu0 0
      %1208 = vmatpush1.bf16.msra.mxu0 0
      %1209 = vmatprep.subr.bf16.mxu0 0
      %1210 = vmatpush1.bf16.msra.mxu0 0
      %1211 = vmatprep.subr.bf16.mxu0 0
      %1212 = vmatpush1.bf16.msra.mxu0 0
      %1213 = vmatprep.mubr.bf16.mxu0 0
      %1214 = vmatmul.mubr.bf16.gmra.mrb[0].mxu0 %v1170
      %v1215 = vpop.f32.mrb[0].mxu0
      %v1216 = vadd.f32 0.0, %v1215
      %v1217 = vpop.f32.mrb[0].mxu0
      %v1218 = vadd.f32 0.0, %v1217
      %v1219 = vpop.f32.mrb[0].mxu0
      %v1220 = vpop.f32.mrb[0].mxu0
      %1221 = vdwg.mxu0
      %1222 = vmatprep.subr.bf16.mxu0 0
      %1223 = vmatpush1.bf16.msra.mxu0 %v1179
      %1224 = vmatprep.subr.bf16.mxu0 0
      %1225 = vmatpush1.bf16.msra.mxu0 0
      %1226 = vmatprep.subr.bf16.mxu0 0
      %1227 = vmatpush1.bf16.msra.mxu0 0
      %1228 = vmatprep.subr.bf16.mxu0 0
      %1229 = vmatpush1.bf16.msra.mxu0 0
      %1230 = vmatprep.subr.bf16.mxu0 0
      %1231 = vmatpush1.bf16.msra.mxu0 0
      %1232 = vmatprep.subr.bf16.mxu0 0
      %1233 = vmatpush1.bf16.msra.mxu0 0
      %1234 = vmatprep.subr.bf16.mxu0 0
      %1235 = vmatpush1.bf16.msra.mxu0 0
      %1236 = vmatprep.subr.bf16.mxu0 0
      %1237 = vmatpush1.bf16.msra.mxu0 0
      %1238 = vmatprep.subr.bf16.mxu0 0
      %1239 = vmatpush1.bf16.msra.mxu0 0
      %1240 = vmatprep.subr.bf16.mxu0 0
      %1241 = vmatpush1.bf16.msra.mxu0 0
      %1242 = vmatprep.subr.bf16.mxu0 0
      %1243 = vmatpush1.bf16.msra.mxu0 0
      %1244 = vmatprep.subr.bf16.mxu0 0
      %1245 = vmatpush1.bf16.msra.mxu0 0
      %1246 = vmatprep.subr.bf16.mxu0 0
      %1247 = vmatpush1.bf16.msra.mxu0 0
      %1248 = vmatprep.subr.bf16.mxu0 0
      %1249 = vmatpush1.bf16.msra.mxu0 0
      %1250 = vmatprep.subr.bf16.mxu0 0
      %1251 = vmatpush1.bf16.msra.mxu0 0
      %1252 = vmatprep.subr.bf16.mxu0 0
      %1253 = vmatpush1.bf16.msra.mxu0 0
      %1254 = vmatprep.mubr.bf16.mxu0 0
      %1255 = vmatmul.mubr.bf16.gmra.mrb[0].mxu0 %v1170
      %v1256 = vpop.f32.mrb[0].mxu0
      %v1257 = vadd.f32 0.0, %v1256
      %v1258 = vpop.f32.mrb[0].mxu0
      %v1259 = vpop.f32.mrb[0].mxu0
      %v1260 = vpop.f32.mrb[0].mxu0
      %1261 = vdwg.mxu0
      %v1262 = vadd.f32 %v1137, %v1216
      %v1263 = vadd.f32 %v1138, %v1218
      %v1264 = vadd.f32 %v1139, %v1257
      %v1265 = vld [vmem:[%s2] sm:$0xff]
      %1267 = vset.pattern.permute.xlu0 0
      %1268 = vperm.xlu0 %1267, %v1265
      %v1269 = vpop.permute.xlu0 %1268
      %v1271 = vadd.f32 %v1262, %v1269
      %v1272 = vadd.f32 %v1263, %v1269
      %v1273 = vadd.f32 %v1264, %v1269
      %1274 = vst [vmem:[%s170] sm:$0xff] %v1271
      %1275 = vst [vmem:[%s170 + $0x8] sm:$0xff] %v1272
      %vm1276 = vcmask 261120
      %1277 = vst.msk [vmem:[%s170 + $0x10] sm:$0xff] %vm1276, %v1273
      %p1278 = scmp.lt.s32.totalorder %s14, 1
      %s1279 = scalar_select %p1278, %s14, 1
      %s1280 = smul.addr %s1279, 3
      %s1281 = smul.addr %s1280, 8
      %s1282 = scalar_lea.vmem %s3, %s1281
      // Predicated region
      $region33: #{conv_layer_forward.1} parent=31 // pred_check
        %p1283 = pneg %p100
      $region34: #{conv_layer_forward.1} parent=31 // pred_check_branch
        %1285 = sbr.rel (%p1283) target = $region36
      $region35: #{conv_layer_forward.1} parent=31 // pred_region
        _
      $region36: #{conv_layer_forward.1} parent=31 // pred_fallthru
        _
    $region32: #{conv_layer_forward.1} parent=5 // pred_fallthru
      _
    %p1286 = scmp.le.s32.totalorder 2, %s9
    // Predicated region
    $region37: #{conv_layer_forward.1} parent=5 // pred_check
      %p1287 = pneg %p1286
    $region38: #{conv_layer_forward.1} parent=5 // pred_check_branch
      %1289 = sbr.rel (%p1287) target = $region40
    $region39: #{conv_layer_forward.1} parent=5 // pred_region
      %s1290 = ssub.s32 %s9, 2
      // Predicated region
      $region41: #{conv_layer_forward.1} parent=39 // pred_check
        %p1291 = pneg %p106
      $region42: #{conv_layer_forward.1} parent=39 // pred_check_branch
        %1293 = sbr.rel (%p1291) target = $region44
      $region43: #{conv_layer_forward.1} parent=39 // pred_region
        %p1294 = scmp.lt.s32.totalorder %s15, 1
        %s1295 = scalar_select %p1294, %s15, 1
        %s1296 = smul.addr %s1295, 3
        %s1297 = smul.addr %s1296, 8
        %s1298 = scalar_lea.vmem %s3, %s1297
      $region44: #{conv_layer_forward.1} parent=39 // pred_fallthru
        _
    $region40: #{conv_layer_forward.1} parent=5 // pred_fallthru
      _
  $region6: #{conv_layer_forward.1} parent=0 // loop_footer
    %s13 = sadd.s32 1, %s9
  $region7: #{conv_layer_forward.1} parent=0 // loop_footer_branch
    %8 = sbr.rel target = $region3
  $region8: #{conv_layer_forward.1} parent=0 // loop_exit
    _

</llo_original>
